<compile_context>
chip_gen: v5e
topology: v5e:2x2
jax: 0.10.0
libtpu: 0.0.40
codegen_flags: <defaults>
</compile_context>

<pallas_src>
import math

import jax
import jax.numpy as jnp
from jax import lax
from jax.experimental import pallas as pl
from jax.experimental.pallas import tpu as pltpu

HH = 50      # hidden width, as in ProteinSegmenter.__init__
LANE = 128   # TPU lane width


def _round_up(x, m):
    return ((x + m - 1) // m) * m


# ----------------------------- kernels -----------------------------

def degree_kernel(adj_ref, d_ref, acc_ref):
    """K-tiled row degree: d_i = rsqrt(sum_j [adj_ij > 0]); zero-degree guarded."""
    k = pl.program_id(1)

    @pl.when(k == 0)
    def _():
        acc_ref[...] = jnp.zeros_like(acc_ref)

    acc_ref[...] += jnp.sum((adj_ref[...] > 0).astype(jnp.float32),
                            axis=1, keepdims=True)

    @pl.when(k == pl.num_programs(1) - 1)
    def _():
        deg = acc_ref[...]
        d_ref[...] = jnp.where(deg > 0.0, lax.rsqrt(deg), 0.0)


def support_kernel(h_ref, w_ref, d_ref, s_ref):
    """S = D^{-1/2} (H @ W)  — row-tiled; used only for the input layer."""
    s = jnp.dot(h_ref[...], w_ref[...], preferred_element_type=jnp.float32)
    s_ref[...] = d_ref[...] * s


def aggregate_fused_kernel(adj_ref, s_ref, d_ref, b_ref, wn_ref, snext_ref, acc_ref):
    """K-tiled (A+I)@S with fused relu + NEXT layer's support.

      acc   += A[i,k] @ S[k]                (f32 accumulation; adj upcast from bf16)
      acc   += S[i]                          (diagonal K block only: the +I term)
      H      = relu(D^{-1/2} * acc + b)      (epilogue, last K step)
      S_next = D^{-1/2} * (H @ W_next)       (second-layer support, emitted directly)
    """
    i = pl.program_id(0)
    k = pl.program_id(1)

    @pl.when(k == 0)
    def _():
        acc_ref[...] = jnp.zeros_like(acc_ref)

    acc_ref[...] += jnp.dot(adj_ref[...].astype(jnp.float32), s_ref[...],
                            preferred_element_type=jnp.float32)

    @pl.when(k == i)
    def _():
        acc_ref[...] += s_ref[...]

    @pl.when(k == pl.num_programs(1) - 1)
    def _():
        h = jnp.maximum(d_ref[...] * acc_ref[...] + b_ref[...], 0.0)
        snext_ref[...] = d_ref[...] * jnp.dot(h, wn_ref[...],
                                              preferred_element_type=jnp.float32)


def aggregate_final_kernel(adj_ref, s_ref, d_ref, b_ref, y_ref, acc_ref):
    """K-tiled output layer: Y = D^{-1/2} ((A+I) @ S) + b  (no relu, no next support)."""
    i = pl.program_id(0)
    k = pl.program_id(1)

    @pl.when(k == 0)
    def _():
        acc_ref[...] = jnp.zeros_like(acc_ref)

    acc_ref[...] += jnp.dot(adj_ref[...].astype(jnp.float32), s_ref[...],
                            preferred_element_type=jnp.float32)

    @pl.when(k == i)
    def _():
        acc_ref[...] += s_ref[...]

    @pl.when(k == pl.num_programs(1) - 1)
    def _():
        y_ref[...] = d_ref[...] * acc_ref[...] + b_ref[...]


# ----------------------------- pallas_call wrappers -----------------------------

_PAR = pltpu.CompilerParams(dimension_semantics=("parallel",))
_PAR_ARB = pltpu.CompilerParams(dimension_semantics=("parallel", "arbitrary"))


def _degree(adj_p, tm):
    n_pad = adj_p.shape[0]
    nb = n_pad // tm
    return pl.pallas_call(
        degree_kernel,
        out_shape=jax.ShapeDtypeStruct((n_pad, 1), jnp.float32),
        grid=(nb, nb),
        in_specs=[pl.BlockSpec((tm, tm), lambda i, k: (i, k))],    # adj (bf16)
        out_specs=pl.BlockSpec((tm, 1), lambda i, k: (i, 0)),
        scratch_shapes=[pltpu.VMEM((tm, 1), jnp.float32)],
        compiler_params=_PAR_ARB,
        cost_estimate=pl.CostEstimate(
            flops=2 * n_pad * n_pad, transcendentals=n_pad,
            bytes_accessed=2 * n_pad * n_pad + 4 * n_pad),
    )(adj_p)


def _support(h, w, d, tm):
    n_pad, f_in = h.shape
    f_out = w.shape[1]
    return pl.pallas_call(
        support_kernel,
        out_shape=jax.ShapeDtypeStruct((n_pad, f_out), jnp.float32),
        grid=(n_pad // tm,),
        in_specs=[pl.BlockSpec((tm, f_in), lambda i: (i, 0)),
                  pl.BlockSpec((f_in, f_out), lambda i: (0, 0)),   # W (resident)
                  pl.BlockSpec((tm, 1), lambda i: (i, 0))],
        out_specs=pl.BlockSpec((tm, f_out), lambda i: (i, 0)),
        compiler_params=_PAR,
        cost_estimate=pl.CostEstimate(
            flops=2 * n_pad * f_in * f_out, transcendentals=0,
            bytes_accessed=4 * (n_pad * f_in + f_in * f_out + n_pad * f_out + n_pad)),
    )(h, w, d)


def _aggregate_fused(adj_p, s, d, b, w_next, tm):
    n_pad = adj_p.shape[0]
    f = s.shape[1]
    fn = w_next.shape[1]
    nb = n_pad // tm
    return pl.pallas_call(
        aggregate_fused_kernel,
        out_shape=jax.ShapeDtypeStruct((n_pad, fn), jnp.float32),
        grid=(nb, nb),
        in_specs=[pl.BlockSpec((tm, tm), lambda i, k: (i, k)),     # adj block (bf16)
                  pl.BlockSpec((tm, f), lambda i, k: (k, 0)),      # S block along K
                  pl.BlockSpec((tm, 1), lambda i, k: (i, 0)),      # d row tile
                  pl.BlockSpec((1, f), lambda i, k: (0, 0)),       # bias (resident)
                  pl.BlockSpec((f, fn), lambda i, k: (0, 0))],     # W_next (resident)
        out_specs=pl.BlockSpec((tm, fn), lambda i, k: (i, 0)),
        scratch_shapes=[pltpu.VMEM((tm, f), jnp.float32)],
        compiler_params=_PAR_ARB,
        cost_estimate=pl.CostEstimate(
            flops=2 * n_pad * n_pad * f + 2 * n_pad * f * fn, transcendentals=0,
            bytes_accessed=2 * n_pad * n_pad + 4 * (nb * n_pad * f + n_pad * fn
                                                    + f * fn + n_pad)),
    )(adj_p, s, d, b, w_next)


def _aggregate_final(adj_p, s, d, b, tm):
    n_pad = adj_p.shape[0]
    f = s.shape[1]
    nb = n_pad // tm
    return pl.pallas_call(
        aggregate_final_kernel,
        out_shape=jax.ShapeDtypeStruct((n_pad, f), jnp.float32),
        grid=(nb, nb),
        in_specs=[pl.BlockSpec((tm, tm), lambda i, k: (i, k)),
                  pl.BlockSpec((tm, f), lambda i, k: (k, 0)),
                  pl.BlockSpec((tm, 1), lambda i, k: (i, 0)),
                  pl.BlockSpec((1, f), lambda i, k: (0, 0))],
        out_specs=pl.BlockSpec((tm, f), lambda i, k: (i, 0)),
        scratch_shapes=[pltpu.VMEM((tm, f), jnp.float32)],
        compiler_params=_PAR_ARB,
        cost_estimate=pl.CostEstimate(
            flops=2 * n_pad * n_pad * f, transcendentals=0,
            bytes_accessed=2 * n_pad * n_pad + 4 * (nb * n_pad * f + n_pad * f
                                                    + n_pad)),
    )(adj_p, s, d, b)


# ----------------------------- forward pass -----------------------------

def prepare_graph(adj, *, row_tile=256):
    """Pad the adjacency ONCE per graph (outside the per-forward hot path), cast it to
    bf16 ({0,1} adjacency is exact in bf16; weighted adjacencies see <=2^-8 relative
    error) and precompute D^{-1/2}.  Padded rows get degree 0 -> d = 0."""
    if row_tile % LANE != 0:
        raise ValueError("row_tile must be a multiple of 128")
    n = adj.shape[0]
    n8 = _round_up(n, 8)
    tm = row_tile if n8 > row_tile else n8          # small graphs: one full-dim block
    n_pad = _round_up(n8, tm)
    adj_p = jnp.zeros((n_pad, n_pad), jnp.bfloat16).at[:n, :n].set(
        adj.astype(jnp.bfloat16))
    d = _degree(adj_p, tm)
    return adj_p, d, tm


def protein_segmenter_forward(x, adj_p, d, tm, params, n_out):
    """Hot-path forward given a prepared (padded, bf16) adjacency and D^{-1/2}."""
    n, nfeat = x.shape
    n_pad = adj_p.shape[0]

    # Lane-dense feature padding (zero-padded weights/bias -> no numerical change).
    f_in_p = _round_up(nfeat, LANE)
    hh_p = _round_up(HH, LANE)
    out_p = _round_up(n_out, LANE)

    x_p = jnp.zeros((n_pad, f_in_p), jnp.float32).at[:n, :nfeat].set(x)

    def pad_w(w, fi, fo):
        return jnp.zeros((fi, fo), jnp.float32).at[:w.shape[0], :w.shape[1]].set(w)

    def pad_b(b, fo):
        return jnp.zeros((1, fo), jnp.float32).at[:, :b.shape[1]].set(b)

    w1 = pad_w(params["w1"], f_in_p, hh_p); b1 = pad_b(params["b1"], hh_p)
    w2 = pad_w(params["w2"], hh_p, hh_p);   b2 = pad_b(params["b2"], hh_p)
    w3 = pad_w(params["w3"], hh_p, out_p);  b3 = pad_b(params["b3"], out_p)

    # TODO(synk): F.dropout with training=True is stochastic (torch RNG); treated as
    # identity here (eval-mode semantics).
    s1 = _support(x_p, w1, d, tm)                      # D^-1/2 (X @ W1)
    s2 = _aggregate_fused(adj_p, s1, d, b1, w2, tm)    # D^-1/2 (relu(A~ S1 + b1) @ W2)
    s3 = _aggregate_fused(adj_p, s2, d, b2, w3, tm)    # D^-1/2 (relu(A~ S2 + b2) @ W3)
    y = _aggregate_final(adj_p, s3, d, b3, tm)         # A~ S3 + b3

    return y[:n, :n_out]


def protein_segmenter(x, adj, params, *, row_tile=256):
    """Forward pass of ProteinSegmenter (eval-mode: dropout = identity)."""
    n_out = params["w3"].shape[1]
    adj_p, d, tm = prepare_graph(adj, row_tile=row_tile)
    return protein_segmenter_forward(x, adj_p, d, tm, params, n_out)


# ----------------------------- params / reference -----------------------------

def init_gcn_params(key, in_features, out_features):
    """Mimic GraphConvolution.reset_parameters: uniform(-stdv, stdv), stdv=1/sqrt(out)."""
    stdv = 1.0 / math.sqrt(out_features)
    kw, kb = jax.random.split(key)
    w = jax.random.uniform(kw, (in_features, out_features), jnp.float32, -stdv, stdv)
    b = jax.random.uniform(kb, (1, out_features), jnp.float32, -stdv, stdv)
    return w, b


def reference_forward(x, adj, params):
    """Plain-JAX reference (mirrors the torch module, eval mode)."""
    deg = jnp.sum((adj > 0.0).astype(jnp.float32), axis=1)
    dd = jnp.diag(deg ** (-0.5))
    a_tilda = dd @ (adj + jnp.eye(adj.shape[0], dtype=adj.dtype)) @ dd

    def layer(h, w, b):
        return a_tilda @ (h @ w) + b

    h = jax.nn.relu(layer(x, params["w1"], params["b1"]))
    h = jax.nn.relu(layer(h, params["w2"], params["b2"]))
    return layer(h, params["w3"], params["b3"])


def _make_case(key, n, nfeat):
    kx, kadj = jax.random.split(key)
    x = jax.random.normal(kx, (n, nfeat), jnp.float32)
    # Symmetric binary adjacency with guaranteed positive degree (self-loops).
    r = jax.random.uniform(kadj, (n, n), jnp.float32)
    adj = ((r + r.T) > 1.0).astype(jnp.float32)
    adj = jnp.maximum(adj, jnp.eye(n, dtype=jnp.float32))
    return x, adj


if __name__ == "__main__":
    NFEAT, N_OUT = 16, 4

    key = jax.random.PRNGKey(0)
    kcase1, kcase2, k1, k2, k3 = jax.random.split(key, 5)

    w1, b1 = init_gcn_params(k1, NFEAT, HH)
    w2, b2 = init_gcn_params(k2, HH, HH)
    w3, b3 = init_gcn_params(k3, HH, N_OUT)
    params = {"w1": w1, "b1": b1, "w2": w2, "b2": b2, "w3": w3, "b3": b3}

    ok = True

    # Case 1: tiny graph (single-block grid: full-dim blocks, grid = (1, 1)).
    x_s, adj_s = _make_case(kcase1, 8, NFEAT)
    y_s = jax.block_until_ready(protein_segmenter(x_s, adj_s, params))
    y_s_ref = reference_forward(x_s, adj_s, params)
    ok &= y_s.shape == (8, N_OUT)
    ok &= bool(jnp.allclose(y_s, y_s_ref, atol=2e-4, rtol=2e-4))

    # Case 2: larger graph exercising the K-tiled accumulator + diagonal +I block
    # (n=200 -> n_pad=256, tm=128, aggregate grid = (2, 2)).
    x_m, adj_m = _make_case(kcase2, 200, NFEAT)
    y_m = jax.block_until_ready(protein_segmenter(x_m, adj_m, params, row_tile=128))
    y_m_ref = reference_forward(x_m, adj_m, params)
    ok &= y_m.shape == (200, N_OUT)
    ok &= bool(jnp.allclose(y_m, y_m_ref, atol=2e-4, rtol=2e-4))

    assert ok, "mismatch vs JAX reference"
    print("KERNEL_OK")
</pallas_src>

<mosaic_0001>
module attributes {stable_mosaic.version = 11 : i64} {
  func.func @degree_kernel(%arg0: i32, %arg1: i32, %arg2: memref<8x8xbf16, #tpu.memory_space<vmem>>, %arg3: memref<8x1xf32, #tpu.memory_space<vmem>>, %arg4: memref<8x1xf32, #tpu.memory_space<vmem>>) attributes {dimension_semantics = [#tpu.dimension_semantics<parallel>, #tpu.dimension_semantics<arbitrary>], iteration_bounds = array<i64: 1, 1>, scalar_prefetch = 0 : i64, scratch_operands = 1 : i64, tpu.core_type = #tpu.core_type<tc>, window_params = [{transform_indices = @transform_0, window_bounds = array<i64: 8, 8>}, {transform_indices = @transform_1, window_bounds = array<i64: 8, 1>}]} {
    %c0_i32 = arith.constant 0 : i32
    %0 = arith.cmpi eq, %arg1, %c0_i32 : i32
    %1 = arith.extui %0 : i1 to i32
    %c0_i32_0 = arith.constant 0 : i32
    %2 = arith.cmpi ne, %1, %c0_i32_0 : i32
    scf.if %2 {
      %cst_9 = arith.constant 0.000000e+00 : f32
      %16 = vector.broadcast %cst_9 : f32 to vector<8x1xf32>
      %c0_10 = arith.constant 0 : index
      %c0_11 = arith.constant 0 : index
      %17 = vector.load %arg4[%c0_10, %c0_11] : memref<8x1xf32, #tpu.memory_space<vmem>>, vector<8x1xf32>
      tpu.vector_store %arg4[%c0_10, %c0_11], %16 {strides = array<i32>} : memref<8x1xf32, #tpu.memory_space<vmem>>, vector<8x1xf32>,
    } else {
    }
    %c0 = arith.constant 0 : index
    %c0_1 = arith.constant 0 : index
    %3 = vector.load %arg4[%c0, %c0_1] : memref<8x1xf32, #tpu.memory_space<vmem>>, vector<8x1xf32>
    %c0_2 = arith.constant 0 : index
    %c0_3 = arith.constant 0 : index
    %4 = vector.load %arg2[%c0_2, %c0_3] : memref<8x8xbf16, #tpu.memory_space<vmem>>, vector<8x8xbf16>
    %cst = arith.constant 0.000000e+00 : bf16
    %5 = vector.broadcast %cst : bf16 to vector<8x8xbf16>
    %6 = arith.cmpf ogt, %4, %5 : vector<8x8xbf16>
    %7 = arith.extui %6 : vector<8x8xi1> to vector<8x8xi32>
    %8 = arith.sitofp %7 : vector<8x8xi32> to vector<8x8xf32>
    %cst_4 = arith.constant dense<0.000000e+00> : vector<8xf32>
    %9 = vector.multi_reduction <add>, %8, %cst_4 [1] : vector<8x8xf32> to vector<8xf32>
    %10 = vector.shape_cast %9 : vector<8xf32> to vector<8x1xf32>
    %11 = arith.addf %3, %10 : vector<8x1xf32>
    %c0_5 = arith.constant 0 : index
    %c0_6 = arith.constant 0 : index
    %12 = vector.load %arg4[%c0_5, %c0_6] : memref<8x1xf32, #tpu.memory_space<vmem>>, vector<8x1xf32>
    tpu.vector_store %arg4[%c0_5, %c0_6], %11 {strides = array<i32>} : memref<8x1xf32, #tpu.memory_space<vmem>>, vector<8x1xf32>,
    %c0_i32_7 = arith.constant 0 : i32
    %13 = arith.cmpi eq, %arg1, %c0_i32_7 : i32
    %14 = arith.extui %13 : i1 to i32
    %c0_i32_8 = arith.constant 0 : i32
    %15 = arith.cmpi ne, %14, %c0_i32_8 : i32
    scf.if %15 {
      %c0_9 = arith.constant 0 : index
      %c0_10 = arith.constant 0 : index
      %16 = vector.load %arg4[%c0_9, %c0_10] : memref<8x1xf32, #tpu.memory_space<vmem>>, vector<8x1xf32>
      %cst_11 = arith.constant 0.000000e+00 : f32
      %17 = vector.broadcast %cst_11 : f32 to vector<8x1xf32>
      %18 = arith.cmpf ogt, %16, %17 : vector<8x1xf32>
      %19 = math.rsqrt %16 : vector<8x1xf32>
      %cst_12 = arith.constant 0.000000e+00 : f32
      %20 = vector.broadcast %cst_12 : f32 to vector<8x1xf32>
      %21 = arith.select %18, %19, %20 : vector<8x1xi1>, vector<8x1xf32>
      %c0_13 = arith.constant 0 : index
      %c0_14 = arith.constant 0 : index
      %22 = vector.load %arg3[%c0_13, %c0_14] : memref<8x1xf32, #tpu.memory_space<vmem>>, vector<8x1xf32>
      tpu.vector_store %arg3[%c0_13, %c0_14], %21 {strides = array<i32>} : memref<8x1xf32, #tpu.memory_space<vmem>>, vector<8x1xf32>,
    } else {
    }
    return
  }
  func.func @transform_0(%arg0: i32, %arg1: i32) -> (i32, i32) {
    %c0_i32 = arith.constant 0 : i32
    return %arg0, %arg1 : i32, i32
  }
  func.func @transform_1(%arg0: i32, %arg1: i32) -> (i32, i32) {
    %c0_i32 = arith.constant 0 : i32
    %c0_i32_0 = arith.constant 0 : i32
    return %arg0, %c0_i32 : i32, i32
  }
}

</mosaic_0001>

<llo_original>
// kernel: tpu_custom_call.1
$region0: #{tpu_custom_call.1}
  #allocation0 [shape = 'u32[]', space=smem, size = 0x4, offset = 0x4, fixed_abs, tag = 'smem constant byte address 0x4 - core index']
  #allocation1 [shape = 'u32[72,128]{1,0:T(1,128)}', space=vmem, size = 0x9000, scoped, tag = 'internal scratch']
  #allocation2 [shape = 'f32[8,1]{1,0:T(8,128)}', space=vmem, size = 0x1000, scoped, tag = 'scratch operand']
  %s0 = inlined_call_operand.hbm [shape: bf16[8,8], index: 0, kind: input, shape index: {}]
  %s1 = inlined_call_operand.vmem [shape: f32[8,1], index: 1, kind: output, shape index: {}]
  %s2 = sld [smem:[#allocation0]]
  $region26: #{tpu_custom_call.1} parent=0
    _
  %s4 = ssub.s32 1, %s2
  %s5 = scalar_select 0, %s4, %s2
  $region1: #{tpu_custom_call.1} parent=0
    #allocation3 [shape = 'u8[2048]{0}', space=vmem, size = 0x800, scoped, tag = 'input window, operand 0, single buffered']
    #allocation4 [shape = 's32[1]{0}', space=sflag, size = 0x4, scoped, tag = 'scoped memory for tpu_custom_call.1']
    %6 = vsyncpa [#allocation4], 0
    // Predicated region
    $region2: #{tpu_custom_call.1} parent=1 // pred_check
      _
    $region3: #{tpu_custom_call.1} parent=1 // pred_check_branch
      %8 = sbr.rel (0) target = $region5
    $region4: #{tpu_custom_call.1} parent=1 // pred_region
      %10 = vsyncadd [#allocation4], 0
      %s12 = sshll.u32 %s0, 4
      %s13 = int_to_ptr.hbm [resolvable:$true] %s12
      %s14 = sshll.u32 [#allocation3], 4
      %s15 = int_to_ptr.vmem [resolvable:$true] %s14
      %17 = dma.hbm_to_vmem [thread:$0]  %s13, 64, %s15, [#allocation4]
    $region5: #{tpu_custom_call.1} parent=1 // pred_fallthru
      _
    // Predicated region
    $region6: #{tpu_custom_call.1} parent=1 // pred_check
      _
    $region7: #{tpu_custom_call.1} parent=1 // pred_check_branch
      %19 = sbr.rel (0) target = $region9
    $region8: #{tpu_custom_call.1} parent=1 // pred_region
      %21 = dma.done [#allocation4], 64
    $region9: #{tpu_custom_call.1} parent=1 // pred_fallthru
      _
    %p22 = scmp.eq.s32.totalorder 0, 0
    // Predicated region
    $region10: #{tpu_custom_call.1} parent=1 // pred_check
      %p23 = pneg %p22
    $region11: #{tpu_custom_call.1} parent=1 // pred_check_branch
      %25 = sbr.rel (%p23) target = $region13
    $region12: #{tpu_custom_call.1} parent=1 // pred_region
      %vm26 = vcmask 7168
      %27 = vst.msk [vmem:[#allocation2] sm:$0xff] %vm26, 0.0
    $region13: #{tpu_custom_call.1} parent=1 // pred_fallthru
      _
    %v28 = vld [vmem:[#allocation2] sm:$0xff]
    %v29 = vld [vmem:[#allocation3] sm:$0xf]
    %v30 = vunpack.c.l.bf16 %v29
    %vm31 = vcmp.gt.f32.partialorder %v30, 0.0
    %v32 = vsel %vm31, 1, 0
    %v33 = vcvt.s32.f32 %v32
    %vm34 = vcmask 64512
    %v35 = vsel %vm34, %v33, 0.0
    %36 = vadd.xlane.f32.xlu0 %v35
    %v37 = vpop.xlane.xlu0 %36
    %v38 = vadd.f32 %v28, %v37
    %vm39 = vcmask 7168
    %40 = vst.msk [vmem:[#allocation2] sm:$0xff] %vm39, %v38
    // Predicated region
    $region14: #{tpu_custom_call.1} parent=1 // pred_check
      %p41 = pneg %p22
    $region15: #{tpu_custom_call.1} parent=1 // pred_check_branch
      %43 = sbr.rel (%p41) target = $region17
    $region16: #{tpu_custom_call.1} parent=1 // pred_region
      %v44 = vld [vmem:[#allocation2] sm:$0xff]
      %vm45 = vcmp.gt.f32.partialorder %v44, 0.0
      %v46 = vrsqrt.pop %v44
      %v47 = vmul.f32 %v46, %v44
      %v48 = vmul.f32 %v47, %v46
      %v49 = vmul.f32 0.5, %v48
      %v50 = vsub.f32 1.5, %v49
      %v51 = vmul.f32 %v46, %v50
      %vm52 = vweird.f32 %v44
      %vm53 = vweird.f32 %v46
      %vm54 = vmor %vm52, %vm53
      %v55 = vsel %vm54, %v46, %v51
      %v56 = vsel %vm45, %v55, 0.0
      %57 = vst.msk [vmem:[%s1] sm:$0xff] %vm39, %v56
    $region17: #{tpu_custom_call.1} parent=1 // pred_fallthru
      _
    // Predicated region
    $region18: #{tpu_custom_call.1} parent=1 // pred_check
      _
    $region19: #{tpu_custom_call.1} parent=1 // pred_check_branch
      %59 = sbr.rel (0) target = $region21
    $region20: #{tpu_custom_call.1} parent=1 // pred_region
      _
    $region21: #{tpu_custom_call.1} parent=1 // pred_fallthru
      _
    // Predicated region
    $region22: #{tpu_custom_call.1} parent=1 // pred_check
      _
    $region23: #{tpu_custom_call.1} parent=1 // pred_check_branch
      %61 = sbr.rel (0) target = $region25
    $region24: #{tpu_custom_call.1} parent=1 // pred_region
      _
    $region25: #{tpu_custom_call.1} parent=1 // pred_fallthru
      _
    %62 = vsyncpa [#allocation4], 1

</llo_original>
